<compile_context>
chip_gen: v6e
topology: v6e:2x2x1
jax: 0.10.0
libtpu: 0.0.40
codegen_flags: <defaults>
</compile_context>

<pallas_src>
import functools

import jax
import jax.numpy as jnp
from jax import lax
from jax.experimental import pallas as pl
from jax.experimental.pallas import tpu as pltpu

LANE = 128
SUB = 8
MAX_BLOCK_ROWS = 4096            # (4096, 128) f32 tile = 2 MiB per input per buffer
VMEM_LIMIT = 32 * 1024 * 1024    # explicit scoped-VMEM budget (fits v5e/v6e/v7x)


def _round_up(x, m):
    return ((x + m - 1) // m) * m


def _sublane_align(dtype):
    """Minimum sublane multiple for a packed dtype block."""
    return {4: 8, 2: 16, 1: 32}.get(jnp.dtype(dtype).itemsize, 8)


def _keep_dtype(x):
    """Keep f32/bf16/f16 in HBM as-is (kernel casts to f32); upcast the rest once."""
    if x.dtype in (jnp.dtype(jnp.float32), jnp.dtype(jnp.bfloat16),
                   jnp.dtype(jnp.float16)):
        return x
    return x.astype(jnp.float32)


def _ipow(x, e):
    """x**e with an exponentiation-by-squaring fast path for small integer e
    (alpha=2 -> 1 mul, gamma=4 -> 2 muls, shortest dependency chain)."""
    ef = float(e)
    if ef.is_integer() and 0 < ef <= 16:
        k = int(ef)
        result, base = None, x
        while k:
            if k & 1:
                result = base if result is None else result * base
            k >>= 1
            if k:
                base = base * base
        return result
    return jnp.power(x, ef)


def _gfl_elementwise(p, t, alpha, gamma):
    """Single-log gaussian focal loss.

    pos branch (t == 1): -log(p + eps) * (1-p)^alpha
    neg branch (t != 1): -log(1-p + eps) * p^alpha * (1-t)^gamma
    Exactly one branch is nonzero per element, so one log + one selected
    modulator reproduces the reference exactly.  (1.0 is exactly representable
    in bf16/f16, so the t == 1 test survives the in-kernel cast to f32.)
    """
    eps = 1e-12
    is_pos = t == 1.0
    one_m_p = 1.0 - p
    log_arg = jnp.where(is_pos, p, one_m_p) + eps
    pos_mod = _ipow(one_m_p, alpha)
    neg_mod = _ipow(p, alpha) * _ipow(1.0 - t, gamma)
    mod = jnp.where(is_pos, pos_mod, neg_mod)
    return -jnp.log(log_arg) * mod


# ----------------------------------------------------------------------------
# Kernels
# ----------------------------------------------------------------------------
def _gfl_sum_kernel(*refs, alpha, gamma, rows, block_rows, blocks_per_split,
                    num_blocks, need_mask, has_overhang):
    """Accumulates per-split partial sums into a resident (1, 8, 128) block."""
    if len(refs) == 4:
        pred_ref, tgt_ref, w_ref, out_ref = refs
    else:
        pred_ref, tgt_ref, out_ref = refs
        w_ref = None

    s = pl.program_id(0)
    j = pl.program_id(1)
    block_idx = s * blocks_per_split + j  # un-clamped logical block index

    @pl.when(j == 0)
    def _():
        out_ref[...] = jnp.zeros_like(out_ref)

    def compute():
        p = pred_ref[...].astype(jnp.float32)
        t = tgt_ref[...].astype(jnp.float32)
        loss = _gfl_elementwise(p, t, alpha, gamma)
        if w_ref is not None:
            loss = loss * w_ref[...].astype(jnp.float32)
        return loss

    def accumulate(loss):
        # Fold (block_rows, 128) -> (8, 128): vreg-tile adds on the VPU only
        # (no per-step cross-lane/XLU reduce), then add into the resident block.
        folded = loss.reshape(block_rows // SUB, SUB, LANE).sum(axis=0)
        out_ref[...] += folded[None, :, :]

    full_blocks = num_blocks - 1 if need_mask else num_blocks

    if need_mask or has_overhang:
        # Steady state: full, in-bounds blocks -> no mask work at all.
        @pl.when(block_idx < full_blocks)
        def _():
            accumulate(compute())

        if need_mask:
            # Exactly one partial block: mask rows beyond the real extent with
            # a SELECT (not multiply) so NaNs from unspecified OOB VMEM are
            # discarded rather than propagated.
            @pl.when(block_idx == num_blocks - 1)
            def _():
                loss = compute()
                row0 = block_idx * block_rows
                ridx = row0 + lax.broadcasted_iota(jnp.int32, loss.shape, 0)
                accumulate(jnp.where(ridx < rows, loss, 0.0))
        # block_idx >= num_blocks (duplicated overhang block from the clamped
        # index_map when num_blocks is odd): contributes nothing.
    else:
        accumulate(compute())


def _gfl_elem_kernel(*refs, alpha, gamma):
    if len(refs) == 4:
        pred_ref, tgt_ref, w_ref, out_ref = refs
        w = w_ref[...].astype(jnp.float32)
    else:
        pred_ref, tgt_ref, out_ref = refs
        w = None
    p = pred_ref[...].astype(jnp.float32)
    t = tgt_ref[...].astype(jnp.float32)
    loss = _gfl_elementwise(p, t, alpha, gamma)
    if w is not None:
        loss = loss * w
    out_ref[...] = loss.astype(out_ref.dtype)


# ----------------------------------------------------------------------------
# Wrapper
# ----------------------------------------------------------------------------
def gaussian_focal_loss_pallas(pred, target, weight=None, reduction="mean",
                               avg_factor=None, alpha=2.0, gamma=4.0):
    """Pallas implementation of mmdet-style gaussian_focal_loss (+ weighting)."""
    assert reduction in ("none", "mean", "sum")
    orig_shape = pred.shape
    pred_f = _keep_dtype(jnp.reshape(pred, (-1,)))
    tgt_f = _keep_dtype(jnp.reshape(target, (-1,)))
    n = int(pred_f.shape[0])

    # Weight handling: scalar / size-1 weights are applied after the kernel
    # (no full-size third HBM plane); elementwise weights ride along as a
    # third kernel input in their native dtype.
    scalar_weight = None
    w_flat = None
    if weight is not None:
        w = jnp.asarray(weight)
        if w.size == 1:
            scalar_weight = w.reshape(()).astype(jnp.float32)
        else:
            w_flat = _keep_dtype(jnp.broadcast_to(w, orig_shape).reshape(-1))

    in_arrays = [pred_f, tgt_f] + ([w_flat] if w_flat is not None else [])
    row_align = max(_sublane_align(x.dtype) for x in in_arrays)

    # ---------------- reduction == 'none' ------------------------------------
    if reduction == "none":
        rows = pl.cdiv(n, LANE)
        block_rows = min(MAX_BLOCK_ROWS, _round_up(rows, row_align))
        num_blocks = pl.cdiv(rows, block_rows)
        pad = rows * LANE - n

        def slab(x):
            if pad:
                x = jnp.pad(x, (0, pad))
            return x.reshape(rows, LANE)

        inputs = [slab(x) for x in in_arrays]
        spec = pl.BlockSpec((block_rows, LANE), lambda i: (i, 0))
        in_bytes = sum(int(x.size) * x.dtype.itemsize for x in inputs)
        cost = pl.CostEstimate(flops=15 * rows * LANE,
                               transcendentals=rows * LANE,
                               bytes_accessed=in_bytes + rows * LANE * 4)

        out = pl.pallas_call(
            functools.partial(_gfl_elem_kernel, alpha=alpha, gamma=gamma),
            out_shape=jax.ShapeDtypeStruct((rows, LANE), jnp.float32),
            grid_spec=pltpu.PrefetchScalarGridSpec(
                num_scalar_prefetch=0,
                grid=(num_blocks,),
                in_specs=[spec] * len(inputs),
                out_specs=spec,
            ),
            compiler_params=pltpu.CompilerParams(
                dimension_semantics=("parallel",),
                vmem_limit_bytes=VMEM_LIMIT),
            cost_estimate=cost,
        )(*inputs)
        out = out.reshape(-1)[:n].reshape(orig_shape)
        if scalar_weight is not None:
            out = out * scalar_weight
        return out

    # ---------------- sum-reduced path ('mean', 'sum', avg_factor) -----------
    rem = n % LANE
    main_n = n - rem

    tail_total = jnp.float32(0.0)
    if rem:
        # <128-element ragged lane tail: cheaper in plain jnp than padding the
        # whole array in HBM just to append a few zeros.
        p_t = pred_f[main_n:].astype(jnp.float32)
        t_t = tgt_f[main_n:].astype(jnp.float32)
        tl = _gfl_elementwise(p_t, t_t, alpha, gamma)
        if w_flat is not None:
            tl = tl * w_flat[main_n:].astype(jnp.float32)
        tail_total = jnp.sum(tl)

    if main_n == 0:
        total = tail_total
    else:
        rows = main_n // LANE
        block_rows = min(MAX_BLOCK_ROWS, _round_up(rows, row_align))
        num_blocks = pl.cdiv(rows, block_rows)
        need_mask = (rows % block_rows) != 0

        # Unconditional 2-way split along a leading "parallel" axis so v7x's
        # two TensorCores each own a partial sum even for odd num_blocks: the
        # index_map is clamped and the duplicated overhang block is skipped
        # in-kernel.  On 1-TC v5e/v6e this is just a sequential outer loop.
        n_split = 2 if num_blocks >= 2 else 1
        blocks_per_split = pl.cdiv(num_blocks, n_split)
        has_overhang = (n_split * blocks_per_split) != num_blocks

        def slab(x):
            return x[:main_n].reshape(rows, LANE)

        inputs = [slab(x) for x in in_arrays]

        in_spec = pl.BlockSpec(
            (block_rows, LANE),
            lambda s, j: (jnp.minimum(s * blocks_per_split + j, num_blocks - 1), 0))
        out_spec = pl.BlockSpec((1, SUB, LANE), lambda s, j: (s, 0, 0))

        kern = functools.partial(
            _gfl_sum_kernel, alpha=alpha, gamma=gamma, rows=rows,
            block_rows=block_rows, blocks_per_split=blocks_per_split,
            num_blocks=num_blocks, need_mask=need_mask,
            has_overhang=has_overhang)

        in_bytes = sum(int(x.size) * x.dtype.itemsize for x in inputs)
        cost = pl.CostEstimate(flops=17 * rows * LANE,
                               transcendentals=rows * LANE,
                               bytes_accessed=in_bytes + n_split * SUB * LANE * 4)

        partials = pl.pallas_call(
            kern,
            out_shape=jax.ShapeDtypeStruct((n_split, SUB, LANE), jnp.float32),
            grid_spec=pltpu.PrefetchScalarGridSpec(
                num_scalar_prefetch=0,
                grid=(n_split, blocks_per_split),
                in_specs=[in_spec] * len(inputs),
                out_specs=out_spec,
            ),
            compiler_params=pltpu.CompilerParams(
                dimension_semantics=("parallel", "arbitrary"),
                vmem_limit_bytes=VMEM_LIMIT),
            cost_estimate=cost,
        )(*inputs)
        total = jnp.sum(partials) + tail_total  # tiny final cross-lane reduce

    if scalar_weight is not None:
        total = total * scalar_weight

    if avg_factor is None:
        if reduction == "mean":
            return total / jnp.float32(n)
        return total  # 'sum'
    if reduction == "mean":
        return total / jnp.float32(avg_factor)
    raise ValueError('avg_factor can not be used with reduction="sum"')


class GaussianFocalLoss:
    """JAX/Pallas port of pcdet GaussianFocalLoss (no learnable params)."""

    def __init__(self, alpha=2.0, gamma=4.0, reduction="mean", loss_weight=1.0):
        self.alpha = alpha
        self.gamma = gamma
        self.reduction = reduction
        self.loss_weight = loss_weight

    def __call__(self, pred, target, weight=None, avg_factor=None,
                 reduction_override=None):
        assert reduction_override in (None, "none", "mean", "sum")
        reduction = reduction_override if reduction_override else self.reduction
        loss = gaussian_focal_loss_pallas(
            pred, target, weight,
            reduction=reduction, avg_factor=avg_factor,
            alpha=self.alpha, gamma=self.gamma,
        )
        return self.loss_weight * loss


# ----------------------------------------------------------------------------
# Reference + self-test
# ----------------------------------------------------------------------------
def _ref_loss(pred, target, weight=None, reduction="mean", avg_factor=None,
              alpha=2.0, gamma=4.0):
    eps = 1e-12
    pos_w = (target == 1.0).astype(jnp.float32)
    neg_w = (1.0 - target) ** gamma
    loss = (-jnp.log(pred + eps) * (1.0 - pred) ** alpha * pos_w
            + -jnp.log(1.0 - pred + eps) * pred ** alpha * neg_w)
    if weight is not None:
        loss = loss * weight
    if avg_factor is None:
        if reduction == "mean":
            return loss.mean()
        if reduction == "sum":
            return loss.sum()
        return loss
    if reduction == "mean":
        return loss.sum() / avg_factor
    return loss


def _make_inputs(key, shape):
    k1, k2, k3 = jax.random.split(key, 3)
    pred = jax.nn.sigmoid(jax.random.normal(k1, shape, jnp.float32))
    target = jax.random.uniform(k2, shape, jnp.float32, 0.0, 0.99)
    peak = jax.random.uniform(k3, shape) > 0.97
    target = jnp.where(peak, jnp.float32(1.0), target)
    return pred, target


if __name__ == "__main__":
    key = jax.random.PRNGKey(0)
    ks = jax.random.split(key, 6)

    loss_mod = GaussianFocalLoss(alpha=2.0, gamma=4.0, reduction="mean",
                                 loss_weight=1.0)

    # 1) Small NCHW heatmap (CenterPoint head), mean reduction.
    B, C, H, W = 2, 4, 16, 16
    pred, target = _make_inputs(ks[0], (B, C, H, W))
    out = jax.block_until_ready(loss_mod(pred, target))
    ref = _ref_loss(pred, target, reduction="mean")
    assert jnp.allclose(out, ref, rtol=1e-5, atol=1e-6), (out, ref)

    # 2) Elementwise ('none') reduction.
    out_none = jax.block_until_ready(
        loss_mod(pred, target, reduction_override="none"))
    ref_none = _ref_loss(pred, target, reduction="none")
    assert out_none.shape == (B, C, H, W)
    assert jnp.allclose(out_none, ref_none, rtol=1e-5, atol=1e-6)

    # 3) Full-plane weight, mean with avg_factor.
    weight = jax.random.uniform(ks[1], (B, C, H, W), jnp.float32, 0.0, 2.0)
    out_w = jax.block_until_ready(loss_mod(pred, target, weight=weight,
                                           avg_factor=37.0))
    ref_w = _ref_loss(pred, target, weight=weight, reduction="mean",
                      avg_factor=37.0)
    assert jnp.allclose(out_w, ref_w, rtol=1e-5, atol=1e-6), (out_w, ref_w)

    # 3b) Scalar weight fast path (no third input plane), sum reduction.
    out_sw = jax.block_until_ready(
        loss_mod(pred, target, weight=2.5, reduction_override="sum"))
    ref_sw = _ref_loss(pred, target, weight=2.5, reduction="sum")
    assert jnp.allclose(out_sw, ref_sw, rtol=1e-5, atol=1e-5), (out_sw, ref_sw)

    # 4) Larger shape: multi-block grid, odd block count (exercises the
    #    clamped 2-way split + overhang skip) and the masked partial block.
    pred_b, target_b = _make_inputs(ks[2], (4, 4, 400, 512))
    out_b = jax.block_until_ready(loss_mod(pred_b, target_b))
    ref_b = _ref_loss(pred_b, target_b, reduction="mean")
    assert jnp.allclose(out_b, ref_b, rtol=1e-4, atol=1e-6), (out_b, ref_b)

    # 5) Ragged size (n % 128 != 0): jnp lane-tail + masked partial block,
    #    both sum and 'none'.
    pred_r, target_r = _make_inputs(ks[3], (3, 5, 17, 19))
    out_r = jax.block_until_ready(
        loss_mod(pred_r, target_r, reduction_override="sum"))
    ref_r = _ref_loss(pred_r, target_r, reduction="sum")
    assert jnp.allclose(out_r, ref_r, rtol=1e-4, atol=1e-5), (out_r, ref_r)
    out_rn = jax.block_until_ready(
        loss_mod(pred_r, target_r, reduction_override="none"))
    ref_rn = _ref_loss(pred_r, target_r, reduction="none")
    assert jnp.allclose(out_rn, ref_rn, rtol=1e-5, atol=1e-6)

    # 6) bf16 inputs stay bf16 in HBM; kernel casts to f32 internally.
    pred_h, target_h = _make_inputs(ks[4], (2, 4, 16, 16))
    pred_h = pred_h.astype(jnp.bfloat16)
    target_h = target_h.astype(jnp.bfloat16)   # 1.0 is exact in bf16
    out_h = jax.block_until_ready(loss_mod(pred_h, target_h))
    ref_h = _ref_loss(pred_h.astype(jnp.float32), target_h.astype(jnp.float32),
                      reduction="mean")
    assert jnp.allclose(out_h, ref_h, rtol=1e-5, atol=1e-6), (out_h, ref_h)

    print("KERNEL_OK")
</pallas_src>

<mosaic_0001>
module attributes {stable_mosaic.version = 11 : i64} {
  func.func @_gfl_sum_kernel(%arg0: i32, %arg1: i32, %arg2: memref<16x128xf32, #tpu.memory_space<vmem>>, %arg3: memref<16x128xf32, #tpu.memory_space<vmem>>, %arg4: memref<1x8x128xf32, #tpu.memory_space<vmem>>) attributes {dimension_semantics = [#tpu.dimension_semantics<parallel>, #tpu.dimension_semantics<arbitrary>], iteration_bounds = array<i64: 1, 1>, scalar_prefetch = 0 : i64, scratch_operands = 0 : i64, tpu.core_type = #tpu.core_type<tc>, window_params = [{transform_indices = @transform_0, window_bounds = array<i64: 16, 128>}, {transform_indices = @transform_1, window_bounds = array<i64: 16, 128>}, {transform_indices = @transform_2, window_bounds = array<i64: 1, 8, 128>}]} {
    %c0_i32 = arith.constant 0 : i32
    %0 = arith.cmpi eq, %arg1, %c0_i32 : i32
    %1 = arith.extui %0 : i1 to i32
    %c0_i32_0 = arith.constant 0 : i32
    %2 = arith.cmpi ne, %1, %c0_i32_0 : i32
    scf.if %2 {
      %cst_15 = arith.constant 0.000000e+00 : f32
      %30 = vector.broadcast %cst_15 : f32 to vector<1x8x128xf32>
      %c0_16 = arith.constant 0 : index
      %c0_17 = arith.constant 0 : index
      %c0_18 = arith.constant 0 : index
      %31 = vector.load %arg4[%c0_16, %c0_17, %c0_18] : memref<1x8x128xf32, #tpu.memory_space<vmem>>, vector<1x8x128xf32>
      tpu.vector_store %arg4[%c0_16, %c0_17, %c0_18], %30 {strides = array<i32>} : memref<1x8x128xf32, #tpu.memory_space<vmem>>, vector<1x8x128xf32>,
    } else {
    }
    %c0 = arith.constant 0 : index
    %c0_1 = arith.constant 0 : index
    %3 = vector.load %arg2[%c0, %c0_1] : memref<16x128xf32, #tpu.memory_space<vmem>>, vector<16x128xf32>
    %c0_2 = arith.constant 0 : index
    %c0_3 = arith.constant 0 : index
    %4 = vector.load %arg3[%c0_2, %c0_3] : memref<16x128xf32, #tpu.memory_space<vmem>>, vector<16x128xf32>
    %cst = arith.constant 1.000000e+00 : f32
    %5 = vector.broadcast %cst : f32 to vector<16x128xf32>
    %6 = arith.cmpf oeq, %4, %5 : vector<16x128xf32>
    %cst_4 = arith.constant 1.000000e+00 : f32
    %7 = vector.broadcast %cst_4 : f32 to vector<16x128xf32>
    %8 = arith.subf %7, %3 : vector<16x128xf32>
    %9 = arith.select %6, %3, %8 : vector<16x128xi1>, vector<16x128xf32>
    %cst_5 = arith.constant 9.99999996E-13 : f32
    %10 = vector.broadcast %cst_5 : f32 to vector<16x128xf32>
    %11 = arith.addf %9, %10 : vector<16x128xf32>
    %12 = arith.mulf %8, %8 : vector<16x128xf32>
    %13 = arith.mulf %3, %3 : vector<16x128xf32>
    %cst_6 = arith.constant 1.000000e+00 : f32
    %14 = vector.broadcast %cst_6 : f32 to vector<16x128xf32>
    %15 = arith.subf %14, %4 : vector<16x128xf32>
    %16 = arith.mulf %15, %15 : vector<16x128xf32>
    %17 = arith.mulf %16, %16 : vector<16x128xf32>
    %18 = arith.mulf %13, %17 : vector<16x128xf32>
    %19 = arith.select %6, %12, %18 : vector<16x128xi1>, vector<16x128xf32>
    %20 = math.log %11 : vector<16x128xf32>
    %cst_7 = arith.constant 0.000000e+00 : f32
    %21 = vector.broadcast %cst_7 : f32 to vector<16x128xf32>
    %22 = arith.subf %21, %20 : vector<16x128xf32>
    %23 = arith.mulf %22, %19 : vector<16x128xf32>
    %24 = vector.shape_cast %23 : vector<16x128xf32> to vector<2x8x128xf32>
    %cst_8 = arith.constant dense<0.000000e+00> : vector<8x128xf32>
    %25 = vector.multi_reduction <add>, %24, %cst_8 [0] : vector<2x8x128xf32> to vector<8x128xf32>
    %c0_9 = arith.constant 0 : index
    %c0_10 = arith.constant 0 : index
    %c0_11 = arith.constant 0 : index
    %26 = vector.load %arg4[%c0_9, %c0_10, %c0_11] : memref<1x8x128xf32, #tpu.memory_space<vmem>>, vector<1x8x128xf32>
    %27 = vector.shape_cast %25 : vector<8x128xf32> to vector<1x8x128xf32>
    %28 = arith.addf %26, %27 : vector<1x8x128xf32>
    %c0_12 = arith.constant 0 : index
    %c0_13 = arith.constant 0 : index
    %c0_14 = arith.constant 0 : index
    %29 = vector.load %arg4[%c0_12, %c0_13, %c0_14] : memref<1x8x128xf32, #tpu.memory_space<vmem>>, vector<1x8x128xf32>
    tpu.vector_store %arg4[%c0_12, %c0_13, %c0_14], %28 {strides = array<i32>} : memref<1x8x128xf32, #tpu.memory_space<vmem>>, vector<1x8x128xf32>,
    return
  }
  func.func @transform_0(%arg0: i32, %arg1: i32) -> (i32, i32) {
    %c1_i32 = arith.constant 1 : i32
    %0 = arith.muli %arg0, %c1_i32 : i32
    %1 = arith.addi %0, %arg1 : i32
    %c0_i32 = arith.constant 0 : i32
    %2 = arith.minsi %1, %c0_i32 : i32
    %c0_i32_0 = arith.constant 0 : i32
    %c0_i32_1 = arith.constant 0 : i32
    return %2, %c0_i32_0 : i32, i32
  }
  func.func @transform_1(%arg0: i32, %arg1: i32) -> (i32, i32) {
    %c1_i32 = arith.constant 1 : i32
    %0 = arith.muli %arg0, %c1_i32 : i32
    %1 = arith.addi %0, %arg1 : i32
    %c0_i32 = arith.constant 0 : i32
    %2 = arith.minsi %1, %c0_i32 : i32
    %c0_i32_0 = arith.constant 0 : i32
    %c0_i32_1 = arith.constant 0 : i32
    return %2, %c0_i32_0 : i32, i32
  }
  func.func @transform_2(%arg0: i32, %arg1: i32) -> (i32, i32, i32) {
    %c0_i32 = arith.constant 0 : i32
    %c0_i32_0 = arith.constant 0 : i32
    %c0_i32_1 = arith.constant 0 : i32
    return %arg0, %c0_i32, %c0_i32_0 : i32, i32, i32
  }
}

</mosaic_0001>

<llo_original>
// kernel: tpu_custom_call.1
$region0: #{tpu_custom_call.1}
  #allocation0 [shape = 'u32[]', space=smem, size = 0x4, offset = 0x4, fixed_abs, tag = 'smem constant byte address 0x4 - core index']
  #allocation1 [shape = 'u32[144,128]{1,0:T(1,128)}', space=vmem, size = 0x12000, scoped, tag = 'internal scratch']
  %s0 = inlined_call_operand.hbm [shape: f32[16,128], index: 0, kind: input, shape index: {}]
  %s1 = inlined_call_operand.hbm [shape: f32[16,128], index: 1, kind: input, shape index: {}]
  %s2 = inlined_call_operand.hbm [shape: f32[1,8,128], index: 2, kind: output, shape index: {}]
  %s3 = sld [smem:[#allocation0]]
  $region30: #{tpu_custom_call.1} parent=0
    _
  %s5 = ssub.s32 1, %s3
  %s6 = scalar_select 0, %s5, %s3
  $region1: #{tpu_custom_call.1} parent=0
    #allocation2 [shape = 'u8[8192]{0}', space=vmem, size = 0x2000, scoped, tag = 'input window, operand 0, single buffered']
    #allocation3 [shape = 's32[1]{0}', space=sflag, size = 0x4, scoped, tag = 'scoped memory for tpu_custom_call.1']
    #allocation4 [shape = 's32[1]{0}', space=sflag, size = 0x4, scoped, tag = 'scoped memory for tpu_custom_call.1']
    #allocation5 [shape = 'u8[8192]{0}', space=vmem, size = 0x2000, scoped, tag = 'input window, operand 1, single buffered']
    #allocation6 [shape = 's32[1]{0}', space=sflag, size = 0x4, scoped, tag = 'scoped memory for tpu_custom_call.1']
    #allocation7 [shape = 'u8[4096]{0}', space=vmem, size = 0x1000, scoped, tag = 'output window, operand 0, single buffered']
    %7 = vsyncpa [#allocation3], 0
    %8 = vsyncpa [#allocation6], 0
    %9 = vsyncpa [#allocation4], 0
    // Predicated region
    $region2: #{tpu_custom_call.1} parent=1 // pred_check
      _
    $region3: #{tpu_custom_call.1} parent=1 // pred_check_branch
      %11 = sbr.rel (0) target = $region5
    $region4: #{tpu_custom_call.1} parent=1 // pred_region
      %s12 = sadd.s32 0, 0
      %p13 = scmp.lt.s32.totalorder %s12, 0
      %s14 = scalar_select %p13, %s12, 0
      %s15 = smul.u32 2, %s14
      %s17 = ssub.s32 256, 256
      %18 = vsyncadd [#allocation3], %s17
      %s19 = smul.addr %s15, 128
      %s20 = scalar_lea.hbm %s0, %s19
      %s21 = sshll.u32 [#allocation2], 4
      %s22 = int_to_ptr.vmem [resolvable:$true] %s21
      %27 = dma.hbm_to_vmem [thread:$0]  %s20, 256, %s22, [#allocation3], 128, 128, 8
    $region5: #{tpu_custom_call.1} parent=1 // pred_fallthru
      _
    // Predicated region
    $region6: #{tpu_custom_call.1} parent=1 // pred_check
      _
    $region7: #{tpu_custom_call.1} parent=1 // pred_check_branch
      %29 = sbr.rel (0) target = $region9
    $region8: #{tpu_custom_call.1} parent=1 // pred_region
      %s30 = sadd.s32 0, 0
      %p31 = scmp.lt.s32.totalorder %s30, 0
      %s32 = scalar_select %p31, %s30, 0
      %s33 = smul.u32 2, %s32
      %s35 = ssub.s32 256, 256
      %36 = vsyncadd [#allocation6], %s35
      %s37 = smul.addr %s33, 128
      %s38 = scalar_lea.hbm %s1, %s37
      %s39 = sshll.u32 [#allocation5], 4
      %s40 = int_to_ptr.vmem [resolvable:$true] %s39
      %45 = dma.hbm_to_vmem [thread:$0]  %s38, 256, %s40, [#allocation6], 128, 128, 8
    $region9: #{tpu_custom_call.1} parent=1 // pred_fallthru
      _
    // Predicated region
    $region10: #{tpu_custom_call.1} parent=1 // pred_check
      _
    $region11: #{tpu_custom_call.1} parent=1 // pred_check_branch
      %47 = sbr.rel (0) target = $region13
    $region12: #{tpu_custom_call.1} parent=1 // pred_region
      %48 = dma.done [#allocation3], 256
    $region13: #{tpu_custom_call.1} parent=1 // pred_fallthru
      _
    // Predicated region
    $region14: #{tpu_custom_call.1} parent=1 // pred_check
      _
    $region15: #{tpu_custom_call.1} parent=1 // pred_check_branch
      %50 = sbr.rel (0) target = $region17
    $region16: #{tpu_custom_call.1} parent=1 // pred_region
      %51 = dma.done [#allocation6], 256
    $region17: #{tpu_custom_call.1} parent=1 // pred_fallthru
      _
    %s52 = sadd.s32 0, 0
    %p53 = scmp.lt.s32.totalorder %s52, 0
    %s54 = scalar_select %p53, %s52, 0
    %s55 = smul.u32 2, %s54
    %s56 = sadd.s32 0, 0
    %p57 = scmp.lt.s32.totalorder %s56, 0
    %s58 = scalar_select %p57, %s56, 0
    %s59 = smul.u32 2, %s58
    %p60 = scmp.eq.s32.totalorder 0, 0
    // Predicated region
    $region18: #{tpu_custom_call.1} parent=1 // pred_check
      %p61 = pneg %p60
    $region19: #{tpu_custom_call.1} parent=1 // pred_check_branch
      %63 = sbr.rel (%p61) target = $region21
    $region20: #{tpu_custom_call.1} parent=1 // pred_region
      %64 = vst [vmem:[#allocation7] sm:$0xff] 0.0
    $region21: #{tpu_custom_call.1} parent=1 // pred_fallthru
      _
    %v65 = vld [vmem:[#allocation2] sm:$0xff]
    %v66 = vld [vmem:[#allocation2 + $0x8] sm:$0xff]
    %v67 = vld [vmem:[#allocation5] sm:$0xff]
    %v68 = vld [vmem:[#allocation5 + $0x8] sm:$0xff]
    %vm69 = vcmp.eq.f32.partialorder %v67, 1.0
    %vm70 = vcmp.eq.f32.partialorder %v68, 1.0
    %v71 = vsub.f32 1.0, %v65
    %v72 = vsub.f32 1.0, %v66
    %v73 = vsel %vm69, %v65, %v71
    %v74 = vsel %vm70, %v66, %v72
    %v75 = vadd.f32 %v73, 1e-12
    %v76 = vadd.f32 %v74, 1e-12
    %v77 = vmul.f32 %v71, %v71
    %v78 = vmul.f32 %v72, %v72
    %v79 = vmul.f32 %v65, %v65
    %v80 = vmul.f32 %v66, %v66
    %v81 = vsub.f32 1.0, %v67
    %v82 = vsub.f32 1.0, %v68
    %v83 = vmul.f32 %v81, %v81
    %v84 = vmul.f32 %v82, %v82
    %v85 = vmul.f32 %v83, %v83
    %v86 = vmul.f32 %v84, %v84
    %v87 = vmul.f32 %v79, %v85
    %v88 = vmul.f32 %v80, %v86
    %v89 = vsel %vm69, %v77, %v87
    %v90 = vsel %vm70, %v78, %v88
    %v91 = vlog2.pop %v75
    %v92 = vmul.f32 %v91, 0.6931472
    %v93 = vlog2.pop %v76
    %v94 = vmul.f32 %v93, 0.6931472
    %v95 = vsub.f32 0.0, %v92
    %v96 = vsub.f32 0.0, %v94
    %v97 = vmul.f32 %v95, %v89
    %v98 = vmul.f32 %v96, %v90
    %v99 = vadd.f32 %v97, %v98
    %v100 = vld [vmem:[#allocation7] sm:$0xff]
    %v101 = vadd.f32 %v100, %v99
    %102 = vst [vmem:[#allocation7] sm:$0xff] %v101
    // Predicated region
    $region22: #{tpu_custom_call.1} parent=1 // pred_check
      _
    $region23: #{tpu_custom_call.1} parent=1 // pred_check_branch
      %104 = sbr.rel (0) target = $region25
    $region24: #{tpu_custom_call.1} parent=1 // pred_region
      %s106 = ssub.s32 128, 128
      %107 = vsyncadd [#allocation4], %s106
      %s109 = sshll.u32 [#allocation7], 4
      %s110 = int_to_ptr.vmem [resolvable:$true] %s109
      %112 = dma.vmem_to_hbm [thread:$0]  %s110, 128, %s2, [#allocation4]
    $region25: #{tpu_custom_call.1} parent=1 // pred_fallthru
      _
    // Predicated region
    $region26: #{tpu_custom_call.1} parent=1 // pred_check
      _
    $region27: #{tpu_custom_call.1} parent=1 // pred_check_branch
      %114 = sbr.rel (0) target = $region29
    $region28: #{tpu_custom_call.1} parent=1 // pred_region
      %115 = dma.done [#allocation4], 128
    $region29: #{tpu_custom_call.1} parent=1 // pred_fallthru
      _
    %116 = vsyncpa [#allocation3], 1
    %117 = vsyncpa [#allocation6], 1
    %118 = vsyncpa [#allocation4], 1

</llo_original>
